<compile_context>
chip_gen: v5e
topology: v5e:2x2
jax: 0.10.0
libtpu: 0.0.40
codegen_flags: <defaults>
</compile_context>

<pallas_src>
import jax
import jax.numpy as jnp
from jax.experimental import pallas as pl
from jax.experimental.pallas import tpu as pltpu


def _round_up(x, m):
    return ((x + m - 1) // m) * m


def fusion_kernel(x_ref, w_ref, b_ref, c_ref, gru_ref, u_ref):
    """One packed matmul produces [q | 0 | 0 | u] at full output width.
    Stores: one unmasked full-width store into gru, one masked store of c into
    the middle half, one store of u from values already in vregs."""
    n_hid = u_ref.shape[-1]

    # Single MXU matmul over the packed input / packed (output-layout) weight:
    #   [tb, num_p + n_y] @ [num_p + n_y, 4*n_hid] -> [tb, 4*n_hid]
    qu = jnp.dot(x_ref[...], w_ref[...], preferred_element_type=jnp.float32)
    qu = jnp.maximum(qu + b_ref[...], 0.0)           # fused bias + ReLU

    # One lane-dense unmasked store of the full-width [q | 0 | 0 | u] tile.
    gru_ref[...] = qu.astype(gru_ref.dtype)
    # One masked store of c into the middle half (overwrites the zero columns).
    gru_ref[:, n_hid:3 * n_hid] = c_ref[...].astype(gru_ref.dtype)
    # Second output: u, written from the same register values (no wrapper slice
    # that would re-read the gru output from HBM).
    u_ref[...] = qu[:, 3 * n_hid:].astype(u_ref.dtype)


def pack_fusion_params(wp, bp, wy, by):
    """Pack the two Linear layers ONCE into the output-layout weight/bias.
    wp: [num_p, n_hid], wy: [n_y, n_hid] (already transposed to [in, out])."""
    num_p, n_hid = wp.shape
    n_y = wy.shape[0]
    k = num_p + n_y
    w_cat = jnp.zeros((k, 4 * n_hid), jnp.float32)
    w_cat = w_cat.at[:num_p, :n_hid].set(wp)          # Wp -> q columns
    w_cat = w_cat.at[num_p:, 3 * n_hid:].set(wy)      # Wy -> u columns
    b_cat = jnp.zeros((1, 4 * n_hid), jnp.float32)
    b_cat = b_cat.at[0, :n_hid].set(bp)
    b_cat = b_cat.at[0, 3 * n_hid:].set(by)
    return w_cat, b_cat


def fusion_forward(c, p, y0, w_cat, b_cat, *, tile_b=1024):
    """c: [B,1,2*n_hid], p: [B,num_p], y0: [B,n_y].
    w_cat: [num_p+n_y, 4*n_hid], b_cat: [1, 4*n_hid] (from pack_fusion_params).
    Returns (gru_input [B,1,4*n_hid], u [B,n_hid])."""
    B = p.shape[0]
    k = w_cat.shape[0]
    n_hid = w_cat.shape[1] // 4

    x_cat = jnp.concatenate([p, y0], axis=-1)         # [B, num_p + n_y]
    c2d = c.reshape(B, 2 * n_hid)                     # [B, 2*n_hid]

    # --- batch tiling: minimal padding, grid >= 2 for large B (v7x 2-TC) -----
    Bp8 = _round_up(B, 8)                             # sublane alignment only
    n_steps = pl.cdiv(Bp8, tile_b)
    if Bp8 >= 256:
        n_steps = max(n_steps, 2)                     # shard batch across 2 TCs
    tb = _round_up(pl.cdiv(Bp8, n_steps), 8)          # per-step row tile
    Bp = tb * n_steps                                 # padding < 8*(n_steps+1)
    if Bp != B:
        pad = Bp - B
        x_cat = jnp.pad(x_cat, ((0, pad), (0, 0)))
        c2d = jnp.pad(c2d, ((0, pad), (0, 0)))

    gru2d, u2d = pl.pallas_call(
        fusion_kernel,
        out_shape=(
            jax.ShapeDtypeStruct((Bp, 4 * n_hid), jnp.float32),
            jax.ShapeDtypeStruct((Bp, n_hid), jnp.float32),
        ),
        grid_spec=pltpu.PrefetchScalarGridSpec(
            num_scalar_prefetch=0,
            grid=(n_steps,),
            in_specs=[
                pl.BlockSpec((tb, k), lambda i: (i, 0)),            # x_cat (row-tiled)
                pl.BlockSpec((k, 4 * n_hid), lambda i: (0, 0)),     # W_cat (VMEM-resident)
                pl.BlockSpec((1, 4 * n_hid), lambda i: (0, 0)),     # b_cat (VMEM-resident)
                pl.BlockSpec((tb, 2 * n_hid), lambda i: (i, 0)),    # c     (row-tiled)
            ],
            out_specs=[
                pl.BlockSpec((tb, 4 * n_hid), lambda i: (i, 0)),    # gru (lane-dense)
                pl.BlockSpec((tb, n_hid), lambda i: (i, 0)),        # u
            ],
        ),
        compiler_params=pltpu.CompilerParams(
            dimension_semantics=("parallel",)),
    )(x_cat, w_cat, b_cat, c2d)

    # Padded rows compute relu(0 + b) (nonzero); they are sliced off here.
    gru2d = gru2d[:B]
    u = u2d[:B]
    return gru2d.reshape(B, 1, 4 * n_hid), u


def init_linear_params(key, in_features, out_features):
    # Matches torch.nn.Linear default init: U(-1/sqrt(in), 1/sqrt(in))
    kw, kb = jax.random.split(key)
    bound = 1.0 / (in_features ** 0.5)
    w = jax.random.uniform(kw, (out_features, in_features), jnp.float32,
                           minval=-bound, maxval=bound)
    b = jax.random.uniform(kb, (out_features,), jnp.float32,
                           minval=-bound, maxval=bound)
    # pre-transpose weight to [in, out] for the kernel
    return w.T, b


if __name__ == "__main__":
    # Small shapes consistent with the module
    batch, num_p, n_hid, n_y = 2, 16, 32, 8

    key = jax.random.PRNGKey(0)
    k_c, k_p, k_y, k_fcp, k_fcy = jax.random.split(key, 5)

    c = jax.random.normal(k_c, (batch, 1, n_hid * 2), jnp.float32)
    p = jax.random.normal(k_p, (batch, num_p), jnp.float32)
    y0 = jax.random.normal(k_y, (batch, n_y), jnp.float32)

    wp, bp = init_linear_params(k_fcp, num_p, n_hid)   # fc_p
    wy, by = init_linear_params(k_fcy, n_y, n_hid)     # fc_y

    # Pack once (parameter-setup time), not per forward call.
    w_cat, b_cat = pack_fusion_params(wp, bp, wy, by)

    gru_input, u = fusion_forward(c, p, y0, w_cat, b_cat)
    jax.block_until_ready((gru_input, u))

    # Reference check in plain JAX
    q_ref = jnp.maximum(p @ wp + bp, 0.0)
    u_ref = jnp.maximum(y0 @ wy + by, 0.0)
    gru_ref = jnp.concatenate(
        [q_ref[:, None, :], c, u_ref[:, None, :]], axis=2)

    assert gru_input.shape == (batch, 1, 4 * n_hid)
    assert u.shape == (batch, n_hid)
    assert jnp.allclose(gru_input, gru_ref, atol=1e-5, rtol=1e-5)
    assert jnp.allclose(u, u_ref, atol=1e-5, rtol=1e-5)

    print("KERNEL_OK")
</pallas_src>

<mosaic_0001>
module attributes {stable_mosaic.version = 11 : i64} {
  func.func @fusion_kernel(%arg0: i32, %arg1: memref<8x24xf32, #tpu.memory_space<vmem>>, %arg2: memref<24x128xf32, #tpu.memory_space<vmem>>, %arg3: memref<1x128xf32, #tpu.memory_space<vmem>>, %arg4: memref<8x64xf32, #tpu.memory_space<vmem>>, %arg5: memref<8x128xf32, #tpu.memory_space<vmem>>, %arg6: memref<8x32xf32, #tpu.memory_space<vmem>>) attributes {dimension_semantics = [#tpu.dimension_semantics<parallel>], iteration_bounds = array<i64: 1>, scalar_prefetch = 0 : i64, scratch_operands = 0 : i64, tpu.core_type = #tpu.core_type<tc>, window_params = [{transform_indices = @transform_0, window_bounds = array<i64: 8, 24>}, {pipeline_mode = #tpu.pipeline_mode<synchronous>, transform_indices = @transform_1, window_bounds = array<i64: 24, 128>}, {pipeline_mode = #tpu.pipeline_mode<synchronous>, transform_indices = @transform_2, window_bounds = array<i64: 1, 128>}, {transform_indices = @transform_3, window_bounds = array<i64: 8, 64>}, {transform_indices = @transform_4, window_bounds = array<i64: 8, 128>}, {transform_indices = @transform_5, window_bounds = array<i64: 8, 32>}]} {
    %c0 = arith.constant 0 : index
    %c0_0 = arith.constant 0 : index
    %0 = vector.load %arg1[%c0, %c0_0] : memref<8x24xf32, #tpu.memory_space<vmem>>, vector<8x24xf32>
    %c0_1 = arith.constant 0 : index
    %c0_2 = arith.constant 0 : index
    %1 = vector.load %arg2[%c0_1, %c0_2] : memref<24x128xf32, #tpu.memory_space<vmem>>, vector<24x128xf32>
    %cst = arith.constant dense<0.000000e+00> : vector<8x128xf32>
    %2 = tpu.matmul %0, %1, %cst {dimension_numbers = #tpu.dot_dimension_numbers<[1], [0], [0], [1], [0, 0, 1, 1], [], []>} : vector<8x24xf32>, vector<24x128xf32>, vector<8x128xf32> -> vector<8x128xf32>
    %c0_3 = arith.constant 0 : index
    %c0_4 = arith.constant 0 : index
    %3 = vector.load %arg3[%c0_3, %c0_4] : memref<1x128xf32, #tpu.memory_space<vmem>>, vector<1x128xf32>
    %4 = vector.broadcast %3 : vector<1x128xf32> to vector<8x128xf32>
    %5 = arith.addf %2, %4 : vector<8x128xf32>
    %cst_5 = arith.constant 0.000000e+00 : f32
    %6 = vector.broadcast %cst_5 : f32 to vector<8x128xf32>
    %7 = arith.maximumf %5, %6 : vector<8x128xf32>
    %c0_6 = arith.constant 0 : index
    %c0_7 = arith.constant 0 : index
    %8 = vector.load %arg5[%c0_6, %c0_7] : memref<8x128xf32, #tpu.memory_space<vmem>>, vector<8x128xf32>
    tpu.vector_store %arg5[%c0_6, %c0_7], %7 {strides = array<i32>} : memref<8x128xf32, #tpu.memory_space<vmem>>, vector<8x128xf32>,
    %c0_8 = arith.constant 0 : index
    %c0_9 = arith.constant 0 : index
    %9 = vector.load %arg4[%c0_8, %c0_9] : memref<8x64xf32, #tpu.memory_space<vmem>>, vector<8x64xf32>
    %c0_10 = arith.constant 0 : index
    %c32 = arith.constant 32 : index
    %10 = vector.load %arg5[%c0_10, %c32] : memref<8x128xf32, #tpu.memory_space<vmem>>, vector<8x64xf32>
    tpu.vector_store %arg5[%c0_10, %c32], %9 {strides = array<i32>} : memref<8x128xf32, #tpu.memory_space<vmem>>, vector<8x64xf32>,
    %11 = vector.extract_strided_slice %7 {offsets = [0, 96], sizes = [8, 32], strides = [1, 1]} : vector<8x128xf32> to vector<8x32xf32>
    %c0_11 = arith.constant 0 : index
    %c0_12 = arith.constant 0 : index
    %12 = vector.load %arg6[%c0_11, %c0_12] : memref<8x32xf32, #tpu.memory_space<vmem>>, vector<8x32xf32>
    tpu.vector_store %arg6[%c0_11, %c0_12], %11 {strides = array<i32>} : memref<8x32xf32, #tpu.memory_space<vmem>>, vector<8x32xf32>,
    return
  }
  func.func @transform_0(%arg0: i32) -> (i32, i32) {
    %c0_i32 = arith.constant 0 : i32
    %c0_i32_0 = arith.constant 0 : i32
    return %arg0, %c0_i32 : i32, i32
  }
  func.func @transform_1(%arg0: i32) -> (i32, i32) {
    %c0_i32 = arith.constant 0 : i32
    %c0_i32_0 = arith.constant 0 : i32
    %c0_i32_1 = arith.constant 0 : i32
    return %c0_i32, %c0_i32_0 : i32, i32
  }
  func.func @transform_2(%arg0: i32) -> (i32, i32) {
    %c0_i32 = arith.constant 0 : i32
    %c0_i32_0 = arith.constant 0 : i32
    %c0_i32_1 = arith.constant 0 : i32
    return %c0_i32, %c0_i32_0 : i32, i32
  }
  func.func @transform_3(%arg0: i32) -> (i32, i32) {
    %c0_i32 = arith.constant 0 : i32
    %c0_i32_0 = arith.constant 0 : i32
    return %arg0, %c0_i32 : i32, i32
  }
  func.func @transform_4(%arg0: i32) -> (i32, i32) {
    %c0_i32 = arith.constant 0 : i32
    %c0_i32_0 = arith.constant 0 : i32
    return %arg0, %c0_i32 : i32, i32
  }
  func.func @transform_5(%arg0: i32) -> (i32, i32) {
    %c0_i32 = arith.constant 0 : i32
    %c0_i32_0 = arith.constant 0 : i32
    return %arg0, %c0_i32 : i32, i32
  }
}

</mosaic_0001>

<llo_original>
// kernel: tpu_custom_call.1
$region0: #{tpu_custom_call.1}
  #allocation0 [shape = 'u32[]', space=smem, size = 0x4, offset = 0x4, fixed_abs, tag = 'smem constant byte address 0x4 - core index']
  #allocation1 [shape = 'u32[72,128]{1,0:T(1,128)}', space=vmem, size = 0x9000, scoped, tag = 'internal scratch']
  %s0 = inlined_call_operand.hbm [shape: f32[8,24], index: 0, kind: input, shape index: {}]
  %s1 = inlined_call_operand.hbm [shape: f32[24,128], index: 1, kind: input, shape index: {}]
  %s2 = inlined_call_operand.vmem [shape: f32[1,128], index: 2, kind: input, shape index: {}]
  %s3 = inlined_call_operand.hbm [shape: f32[8,64], index: 3, kind: input, shape index: {}]
  %s4 = inlined_call_operand.hbm [shape: f32[8,128], index: 4, kind: output, shape index: {0}]
  %s5 = inlined_call_operand.hbm [shape: f32[8,32], index: 5, kind: output, shape index: {1}]
  %6 = xla_tuple %s4, %s5
  %s7 = sld [smem:[#allocation0]]
  $region46: #{tpu_custom_call.1} parent=0
    _
  %s9 = ssub.s32 1, %s7
  %s10 = scalar_select 0, %s9, %s7
  $region1: #{tpu_custom_call.1} parent=0
    #allocation2 [shape = 'u8[4096]{0}', space=vmem, size = 0x1000, scoped, tag = 'input window, operand 0, single buffered']
    #allocation3 [shape = 's32[1]{0}', space=sflag, size = 0x4, scoped, tag = 'scoped memory for tpu_custom_call.1']
    #allocation4 [shape = 's32[1]{0}', space=sflag, size = 0x4, scoped, tag = 'scoped memory for tpu_custom_call.1']
    #allocation5 [shape = 'u8[12288]{0}', space=vmem, size = 0x3000, scoped, tag = 'input window, operand 1, single buffered']
    #allocation6 [shape = 's32[1]{0}', space=sflag, size = 0x4, scoped, tag = 'scoped memory for tpu_custom_call.1']
    #allocation7 [shape = 'u8[4096]{0}', space=vmem, size = 0x1000, scoped, tag = 'input window, operand 3, single buffered']
    #allocation8 [shape = 'u8[4096]{0}', space=vmem, size = 0x1000, scoped, tag = 'output window, operand 0, single buffered']
    #allocation9 [shape = 'u8[4096]{0}', space=vmem, size = 0x1000, scoped, tag = 'output window, operand 1, single buffered']
    #allocation10 [shape = 's32[1]{0}', space=sflag, size = 0x4, scoped, tag = 'scoped memory for tpu_custom_call.1']
    %11 = vsyncpa [#allocation3], 0
    %12 = vsyncpa [#allocation6], 0
    %13 = vsyncpa [#allocation4], 0
    %14 = vsyncpa [#allocation10], 0
    // Predicated region
    $region2: #{tpu_custom_call.1} parent=1 // pred_check
      _
    $region3: #{tpu_custom_call.1} parent=1 // pred_check_branch
      %16 = sbr.rel (0) target = $region5
    $region4: #{tpu_custom_call.1} parent=1 // pred_region
      %18 = vsyncadd [#allocation3], 0
      %s20 = sshll.u32 %s0, 4
      %s21 = int_to_ptr.hbm [resolvable:$true] %s20
      %s22 = sshll.u32 [#allocation2], 4
      %s23 = int_to_ptr.vmem [resolvable:$true] %s22
      %25 = dma.hbm_to_vmem [thread:$0]  %s21, 128, %s23, [#allocation3]
    $region5: #{tpu_custom_call.1} parent=1 // pred_fallthru
      _
    // Predicated region
    $region6: #{tpu_custom_call.1} parent=1 // pred_check
      _
    $region7: #{tpu_custom_call.1} parent=1 // pred_check_branch
      %27 = sbr.rel (0) target = $region9
    $region8: #{tpu_custom_call.1} parent=1 // pred_region
      %29 = vsyncadd [#allocation6], 0
      %s30 = sshll.u32 %s1, 4
      %s31 = int_to_ptr.hbm [resolvable:$true] %s30
      %s32 = sshll.u32 [#allocation5], 4
      %s33 = int_to_ptr.vmem [resolvable:$true] %s32
      %38 = dma.hbm_to_vmem [thread:$0]  %s31, 384, %s33, [#allocation6], 128, 128, 8
    $region9: #{tpu_custom_call.1} parent=1 // pred_fallthru
      _
    // Predicated region
    $region10: #{tpu_custom_call.1} parent=1 // pred_check
      _
    $region11: #{tpu_custom_call.1} parent=1 // pred_check_branch
      %40 = sbr.rel (0) target = $region13
    $region12: #{tpu_custom_call.1} parent=1 // pred_region
      _
    $region13: #{tpu_custom_call.1} parent=1 // pred_fallthru
      _
    // Predicated region
    $region14: #{tpu_custom_call.1} parent=1 // pred_check
      _
    $region15: #{tpu_custom_call.1} parent=1 // pred_check_branch
      %42 = sbr.rel (0) target = $region17
    $region16: #{tpu_custom_call.1} parent=1 // pred_region
      %44 = vsyncadd [#allocation6], 0
      %s46 = sshll.u32 %s3, 4
      %s47 = int_to_ptr.hbm [resolvable:$true] %s46
      %s48 = sshll.u32 [#allocation7], 4
      %s49 = int_to_ptr.vmem [resolvable:$true] %s48
      %51 = dma.hbm_to_vmem [thread:$0]  %s47, 128, %s49, [#allocation6]
    $region17: #{tpu_custom_call.1} parent=1 // pred_fallthru
      _
    // Predicated region
    $region18: #{tpu_custom_call.1} parent=1 // pred_check
      _
    $region19: #{tpu_custom_call.1} parent=1 // pred_check_branch
      %53 = sbr.rel (0) target = $region21
    $region20: #{tpu_custom_call.1} parent=1 // pred_region
      %55 = dma.done [#allocation3], 128
    $region21: #{tpu_custom_call.1} parent=1 // pred_fallthru
      _
    // Predicated region
    $region22: #{tpu_custom_call.1} parent=1 // pred_check
      _
    $region23: #{tpu_custom_call.1} parent=1 // pred_check_branch
      %57 = sbr.rel (0) target = $region25
    $region24: #{tpu_custom_call.1} parent=1 // pred_region
      %59 = dma.done [#allocation6], 384
    $region25: #{tpu_custom_call.1} parent=1 // pred_fallthru
      _
    // Predicated region
    $region26: #{tpu_custom_call.1} parent=1 // pred_check
      _
    $region27: #{tpu_custom_call.1} parent=1 // pred_check_branch
      %61 = sbr.rel (0) target = $region29
    $region28: #{tpu_custom_call.1} parent=1 // pred_region
      %63 = dma.done [#allocation6], 128
    $region29: #{tpu_custom_call.1} parent=1 // pred_fallthru
      _
    %v64 = vld [vmem:[#allocation2] sm:$0xff]
    %v65 = vld [vmem:[#allocation5] sm:$0xff]
    %v66 = vld [vmem:[#allocation5 + $0x8] sm:$0xff]
    %v67 = vld [vmem:[#allocation5 + $0x10] sm:$0xff]
    %v68 = vld [vmem:[%s2] sm:$0x1]
    %v70 = vperm.slane %v68, 0
    %vm72 = vcmask 195584
    %v74 = vsel %vm72, %v64, 0
    %76 = vmatpush.msra.mxu0 0.0
    %77 = vmatpush.msra.mxu0 0.0
    %78 = vmatpush.msra.mxu0 0.0
    %79 = vmatpush.msra.mxu0 0.0
    %80 = vmatpush.msra.mxu0 0.0
    %81 = vmatpush.msra.mxu0 0.0
    %82 = vmatpush.msra.mxu0 0.0
    %83 = vmatpush.msra.mxu0 0.0
    %84 = vmatpush.msra.mxu0 0.0
    %85 = vmatpush.msra.mxu0 0.0
    %86 = vmatpush.msra.mxu0 0.0
    %87 = vmatpush.msra.mxu0 0.0
    %88 = vmatpush.msra.mxu0 0.0
    %89 = vmatpush.msra.mxu0 %v67
    %90 = vmatpush.msra.mxu0 %v66
    %91 = vmatpush.msra.mxu0 %v65
    %92 = vmatmul.f32.gmra.mxu0 %v74
    %v93 = vpop.f32.mrf.mxu0
    %v94 = vadd.f32 %v70, %v93
    %95 = vdwg.mxu0
    %v96 = vmax.f32 %v94, 0.0
    %97 = vst [vmem:[#allocation8] sm:$0xff] %v96
    %v98 = vld [vmem:[#allocation7] sm:$0xff]
    %100 = vrot.lane.b32.xlu0 %v98, 32
    %v101 = vpop.permute.xlu0 %100
    %vm103 = vcmask 785664
    %104 = vst.msk [vmem:[#allocation8] sm:$0xff] %vm103, %v101
    %106 = vrot.lane.b32.xlu0 %v96, 32
    %v107 = vpop.permute.xlu0 %106
    %vm109 = vcmask 261120
    %110 = vst.msk [vmem:[#allocation9] sm:$0xff] %vm109, %v107
    // Predicated region
    $region30: #{tpu_custom_call.1} parent=1 // pred_check
      _
    $region31: #{tpu_custom_call.1} parent=1 // pred_check_branch
      %112 = sbr.rel (0) target = $region33
    $region32: #{tpu_custom_call.1} parent=1 // pred_region
      %114 = vsyncadd [#allocation4], 0
      %s116 = sshll.u32 [#allocation8], 4
      %s117 = int_to_ptr.vmem [resolvable:$true] %s116
      %s118 = sshll.u32 %s4, 4
      %s119 = int_to_ptr.hbm [resolvable:$true] %s118
      %121 = dma.vmem_to_hbm [thread:$0]  %s117, 128, %s119, [#allocation4]
    $region33: #{tpu_custom_call.1} parent=1 // pred_fallthru
      _
    // Predicated region
    $region34: #{tpu_custom_call.1} parent=1 // pred_check
      _
    $region35: #{tpu_custom_call.1} parent=1 // pred_check_branch
      %123 = sbr.rel (0) target = $region37
    $region36: #{tpu_custom_call.1} parent=1 // pred_region
      %125 = vsyncadd [#allocation10], 0
      %s127 = sshll.u32 [#allocation9], 4
      %s128 = int_to_ptr.vmem [resolvable:$true] %s127
      %s129 = sshll.u32 %s5, 4
      %s130 = int_to_ptr.hbm [resolvable:$true] %s129
      %132 = dma.vmem_to_hbm [thread:$0]  %s128, 128, %s130, [#allocation10]
    $region37: #{tpu_custom_call.1} parent=1 // pred_fallthru
      _
    // Predicated region
    $region38: #{tpu_custom_call.1} parent=1 // pred_check
      _
    $region39: #{tpu_custom_call.1} parent=1 // pred_check_branch
      %134 = sbr.rel (0) target = $region41
    $region40: #{tpu_custom_call.1} parent=1 // pred_region
      %136 = dma.done [#allocation4], 128
    $region41: #{tpu_custom_call.1} parent=1 // pred_fallthru
      _
    // Predicated region
    $region42: #{tpu_custom_call.1} parent=1 // pred_check
      _
    $region43: #{tpu_custom_call.1} parent=1 // pred_check_branch
      %138 = sbr.rel (0) target = $region45
    $region44: #{tpu_custom_call.1} parent=1 // pred_region
      %140 = dma.done [#allocation10], 128
    $region45: #{tpu_custom_call.1} parent=1 // pred_fallthru
      _
    %141 = vsyncpa [#allocation3], 1
    %142 = vsyncpa [#allocation6], 1
    %143 = vsyncpa [#allocation4], 1
    %144 = vsyncpa [#allocation10], 1

</llo_original>
